<compile_context>
chip_gen: v7x
topology: tpu7x:2x2x1
jax: 0.10.0
libtpu: 0.0.40
codegen_flags: <defaults>
</compile_context>

<pallas_src>
import jax
import jax.numpy as jnp
from jax.experimental import pallas as pl
from jax.experimental.pallas import tpu as pltpu


def _make_outconv_kernel(c_in, c_out):
    """Build a kernel closed over the (static, tiny) channel counts."""

    def kernel(w_ref, b_ref, x_ref, o_ref):
        # w_ref: VMEM (c_out, c_in, 1)   -- weight columns, resident across grid
        # b_ref: SMEM (c_out,)           -- bias scalars
        # x_ref: VMEM (n_tile, c_in, tile_m)  -- pixels in lanes (lane-dense)
        # o_ref: VMEM (n_tile, c_out, tile_m) -- pixels in lanes (lane-dense)
        x = x_ref[...]                                   # keep input dtype (f32)
        for co in range(c_out):                          # static unroll: tiny C_out
            w_col = w_ref[co]                            # (c_in, 1), broadcasts over
                                                         # batch (dim 0) and lanes
            prod = x * w_col                             # full-block VPU multiply
            acc = jnp.sum(prod, axis=1, keepdims=True)   # channel (sublane) reduce -> XLU
            # Direct row store (no concatenate temporary).
            o_ref[:, co:co + 1, :] = (acc + b_ref[co]).astype(o_ref.dtype)

    return kernel


def _choose_blocks(N, HW, c_in, c_out, itemsize):
    """Pick (n_tile, tile_m).

    Keeps the double-buffered in+out working set around ~8 MiB (well under the
    v5e 16 MiB scoped-VMEM default and v7x's 64 MiB physical VMEM), makes each
    grid step move multi-hundred-KiB-to-MiB slabs (amortizes the ~0.35 us
    per-step overhead), and — when the problem is large enough — keeps >= 8 grid
    steps so v7x megacore ('parallel' axes) has work for both TensorCores.
    """
    bytes_per_pixel = (c_in + c_out) * itemsize          # input + output bytes / pixel
    hw_padded = pl.cdiv(HW, 128) * 128

    vmem_budget = 8 * 1024 * 1024                        # double-buffered in+out tiles
    max_lanes = max(128, (vmem_budget // (2 * bytes_per_pixel)) // 128 * 128)

    target_steps = 8                                     # >= 4 per TC on v7x megacore
    min_step_bytes = 256 * 1024                          # don't shrink steps below this

    if hw_padded > max_lanes:
        # Large feature map: one image per step, tile the pixel axis.
        n_tile = 1
        tile_m = max_lanes
        if N * pl.cdiv(HW, tile_m) < target_steps:
            # Shrink the pixel tile so both v7x cores get work, but never below
            # ~min_step_bytes of per-step traffic.
            want = pl.cdiv(pl.cdiv(HW, pl.cdiv(target_steps, N)), 128) * 128
            floor = pl.cdiv(min_step_bytes // bytes_per_pixel, 128) * 128
            tile_m = int(min(max_lanes, max(want, floor, 128)))
    else:
        # Small/medium feature map: whole image per step, block the batch axis
        # so each DMA still moves a big contiguous slab.
        tile_m = HW                                      # full extent (no 128 constraint)
        per_image_bytes = hw_padded * bytes_per_pixel
        n_tile = int(max(1, min(N, vmem_budget // (2 * per_image_bytes))))
        # Prefer >= target_steps steps only while each step still moves enough.
        while (pl.cdiv(N, n_tile) < target_steps and n_tile > 1
               and (n_tile // 2) * per_image_bytes >= min_step_bytes):
            n_tile //= 2
    return int(n_tile), int(tile_m)


def outconv_pallas(x_nchw, weight, bias, *, n_tile=None, tile_m=None):
    """1x1 Conv2d forward (matches PyTorch nn.Conv2d(C_in, C_out, 1)).

    x_nchw: (N, C_in, H, W) float32
    weight: (C_out, C_in, 1, 1) float32
    bias:   (C_out,) float32
    returns (N, C_out, H, W) float32
    """
    N, C_in, H, W = x_nchw.shape
    C_out = weight.shape[0]
    HW = H * W

    # Channel-major, zero-transpose layout plumbing (pure reshapes).
    x_flat = x_nchw.reshape(N, C_in, HW)            # (N, C_in, M)
    w_cols = weight.reshape(C_out, C_in, 1)         # per-output weight columns (VMEM)
    b_vec = bias.reshape(C_out)                     # (C_out,) -> SMEM scalars

    if n_tile is None or tile_m is None:
        auto_n, auto_m = _choose_blocks(N, HW, C_in, C_out, x_nchw.dtype.itemsize)
        if n_tile is None:
            n_tile = auto_n
        if tile_m is None:
            tile_m = auto_m

    grid = (pl.cdiv(N, n_tile), pl.cdiv(HW, tile_m))

    cost = pl.CostEstimate(
        flops=2 * N * HW * C_in * C_out,
        transcendentals=0,
        bytes_accessed=int(
            x_nchw.dtype.itemsize * (N * HW * (C_in + C_out) + C_in * C_out + C_out)
        ),
    )

    out_flat = pl.pallas_call(
        _make_outconv_kernel(C_in, C_out),
        out_shape=jax.ShapeDtypeStruct((N, C_out, HW), x_nchw.dtype),
        grid=grid,
        in_specs=[
            # Weight columns: tiny, constant block index -> stays resident in VMEM.
            pl.BlockSpec((C_out, C_in, 1), lambda n, i: (0, 0, 0)),
            # Bias scalars in SMEM.
            pl.BlockSpec(memory_space=pltpu.MemorySpace.SMEM),
            # Streaming input tile.  (If profiling ever shows exposed input DMA,
            # pipeline_mode=pl.Buffered(3) here is the cheap next step.)
            pl.BlockSpec((n_tile, C_in, tile_m), lambda n, i: (n, 0, i)),
        ],
        out_specs=pl.BlockSpec((n_tile, C_out, tile_m), lambda n, i: (n, 0, i)),
        compiler_params=pltpu.CompilerParams(
            dimension_semantics=("parallel", "parallel"),
        ),
        cost_estimate=cost,
    )(w_cols, b_vec, x_flat)

    return out_flat.reshape(N, C_out, H, W)


if __name__ == "__main__":
    key = jax.random.PRNGKey(0)
    kx, kw, kb = jax.random.split(key, 3)

    N, C_in, C_out, H, W = 2, 4, 3, 16, 16

    x = jax.random.normal(kx, (N, C_in, H, W), dtype=jnp.float32)
    # Deterministic synthetic Conv2d(C_in, C_out, kernel_size=1) parameters.
    weight = jax.random.normal(kw, (C_out, C_in, 1, 1), dtype=jnp.float32) * 0.1
    bias = jax.random.normal(kb, (C_out,), dtype=jnp.float32) * 0.1

    # Reference: plain-JAX 1x1 conv (channel einsum) + bias.
    ref = (
        jnp.einsum("nchw,oc->nohw", x, weight.reshape(C_out, C_in))
        + bias[None, :, None, None]
    )

    # 1) Auto-tiled path (batch-blocked for this small feature map).
    out = outconv_pallas(x, weight, bias)
    jax.block_until_ready(out)
    assert out.shape == (N, C_out, H, W)
    assert jnp.allclose(out, ref, atol=1e-5, rtol=1e-5)

    # 2) Explicit multi-step grid (exercises the pixel-tiled path) — same result.
    out2 = outconv_pallas(x, weight, bias, n_tile=1, tile_m=128)
    jax.block_until_ready(out2)
    assert jnp.allclose(out2, ref, atol=1e-5, rtol=1e-5)

    # TODO(synk): the module instantiates nn.Sigmoid but never applies it in
    # forward(), so it is intentionally omitted here.
    print("KERNEL_OK")
</pallas_src>

<mosaic_0001>
module attributes {stable_mosaic.version = 11 : i64} {
  func.func @kernel(%arg0: i32, %arg1: i32, %arg2: memref<3x4x1xf32, #tpu.memory_space<vmem>>, %arg3: memref<3xf32, #tpu.memory_space<smem>>, %arg4: memref<2x4x256xf32, #tpu.memory_space<vmem>>, %arg5: memref<2x3x256xf32, #tpu.memory_space<vmem>>) attributes {dimension_semantics = [#tpu.dimension_semantics<parallel>, #tpu.dimension_semantics<parallel>], iteration_bounds = array<i64: 1, 1>, scalar_prefetch = 0 : i64, scratch_operands = 0 : i64, tpu.core_type = #tpu.core_type<tc>, window_params = [{pipeline_mode = #tpu.pipeline_mode<synchronous>, transform_indices = @transform_0, window_bounds = array<i64: 3, 4, 1>}, {transform_indices = @transform_1, window_bounds = array<i64: 3>}, {transform_indices = @transform_2, window_bounds = array<i64: 2, 4, 256>}, {transform_indices = @transform_3, window_bounds = array<i64: 2, 3, 256>}]} {
    %c0 = arith.constant 0 : index
    %c0_0 = arith.constant 0 : index
    %c0_1 = arith.constant 0 : index
    %0 = vector.load %arg4[%c0, %c0_0, %c0_1] : memref<2x4x256xf32, #tpu.memory_space<vmem>>, vector<2x4x256xf32>
    %c0_2 = arith.constant 0 : index
    %c0_3 = arith.constant 0 : index
    %c0_4 = arith.constant 0 : index
    %1 = vector.load %arg2[%c0_2, %c0_3, %c0_4] : memref<3x4x1xf32, #tpu.memory_space<vmem>>, vector<1x4x1xf32>
    %2 = vector.shape_cast %1 : vector<1x4x1xf32> to vector<4x1xf32>
    %3 = vector.shape_cast %2 : vector<4x1xf32> to vector<1x4x1xf32>
    %4 = vector.broadcast %3 : vector<1x4x1xf32> to vector<2x4x256xf32>
    %5 = arith.mulf %0, %4 : vector<2x4x256xf32>
    %cst = arith.constant dense<0.000000e+00> : vector<2x256xf32>
    %6 = vector.multi_reduction <add>, %5, %cst [1] : vector<2x4x256xf32> to vector<2x256xf32>
    %7 = vector.shape_cast %6 : vector<2x256xf32> to vector<2x1x256xf32>
    %c0_5 = arith.constant 0 : index
    %8 = memref.load %arg3[%c0_5] : memref<3xf32, #tpu.memory_space<smem>>
    %9 = vector.broadcast %8 : f32 to vector<2x1x256xf32>
    %10 = arith.addf %7, %9 : vector<2x1x256xf32>
    %c0_6 = arith.constant 0 : index
    %c0_7 = arith.constant 0 : index
    %c0_8 = arith.constant 0 : index
    %11 = vector.load %arg5[%c0_6, %c0_7, %c0_8] : memref<2x3x256xf32, #tpu.memory_space<vmem>>, vector<2x1x256xf32>
    tpu.vector_store %arg5[%c0_6, %c0_7, %c0_8], %10 {strides = array<i32>} : memref<2x3x256xf32, #tpu.memory_space<vmem>>, vector<2x1x256xf32>,
    %c1 = arith.constant 1 : index
    %c0_9 = arith.constant 0 : index
    %c0_10 = arith.constant 0 : index
    %12 = vector.load %arg2[%c1, %c0_9, %c0_10] : memref<3x4x1xf32, #tpu.memory_space<vmem>>, vector<1x4x1xf32>
    %13 = vector.shape_cast %12 : vector<1x4x1xf32> to vector<4x1xf32>
    %14 = vector.shape_cast %13 : vector<4x1xf32> to vector<1x4x1xf32>
    %15 = vector.broadcast %14 : vector<1x4x1xf32> to vector<2x4x256xf32>
    %16 = arith.mulf %0, %15 : vector<2x4x256xf32>
    %cst_11 = arith.constant dense<0.000000e+00> : vector<2x256xf32>
    %17 = vector.multi_reduction <add>, %16, %cst_11 [1] : vector<2x4x256xf32> to vector<2x256xf32>
    %18 = vector.shape_cast %17 : vector<2x256xf32> to vector<2x1x256xf32>
    %c1_12 = arith.constant 1 : index
    %19 = memref.load %arg3[%c1_12] : memref<3xf32, #tpu.memory_space<smem>>
    %20 = vector.broadcast %19 : f32 to vector<2x1x256xf32>
    %21 = arith.addf %18, %20 : vector<2x1x256xf32>
    %c0_13 = arith.constant 0 : index
    %c1_14 = arith.constant 1 : index
    %c0_15 = arith.constant 0 : index
    %22 = vector.load %arg5[%c0_13, %c1_14, %c0_15] : memref<2x3x256xf32, #tpu.memory_space<vmem>>, vector<2x1x256xf32>
    tpu.vector_store %arg5[%c0_13, %c1_14, %c0_15], %21 {strides = array<i32>} : memref<2x3x256xf32, #tpu.memory_space<vmem>>, vector<2x1x256xf32>,
    %c2 = arith.constant 2 : index
    %c0_16 = arith.constant 0 : index
    %c0_17 = arith.constant 0 : index
    %23 = vector.load %arg2[%c2, %c0_16, %c0_17] : memref<3x4x1xf32, #tpu.memory_space<vmem>>, vector<1x4x1xf32>
    %24 = vector.shape_cast %23 : vector<1x4x1xf32> to vector<4x1xf32>
    %25 = vector.shape_cast %24 : vector<4x1xf32> to vector<1x4x1xf32>
    %26 = vector.broadcast %25 : vector<1x4x1xf32> to vector<2x4x256xf32>
    %27 = arith.mulf %0, %26 : vector<2x4x256xf32>
    %cst_18 = arith.constant dense<0.000000e+00> : vector<2x256xf32>
    %28 = vector.multi_reduction <add>, %27, %cst_18 [1] : vector<2x4x256xf32> to vector<2x256xf32>
    %29 = vector.shape_cast %28 : vector<2x256xf32> to vector<2x1x256xf32>
    %c2_19 = arith.constant 2 : index
    %30 = memref.load %arg3[%c2_19] : memref<3xf32, #tpu.memory_space<smem>>
    %31 = vector.broadcast %30 : f32 to vector<2x1x256xf32>
    %32 = arith.addf %29, %31 : vector<2x1x256xf32>
    %c0_20 = arith.constant 0 : index
    %c2_21 = arith.constant 2 : index
    %c0_22 = arith.constant 0 : index
    %33 = vector.load %arg5[%c0_20, %c2_21, %c0_22] : memref<2x3x256xf32, #tpu.memory_space<vmem>>, vector<2x1x256xf32>
    tpu.vector_store %arg5[%c0_20, %c2_21, %c0_22], %32 {strides = array<i32>} : memref<2x3x256xf32, #tpu.memory_space<vmem>>, vector<2x1x256xf32>,
    return
  }
  func.func @transform_0(%arg0: i32, %arg1: i32) -> (i32, i32, i32) {
    %c0_i32 = arith.constant 0 : i32
    %c0_i32_0 = arith.constant 0 : i32
    %c0_i32_1 = arith.constant 0 : i32
    %c0_i32_2 = arith.constant 0 : i32
    return %c0_i32, %c0_i32_0, %c0_i32_1 : i32, i32, i32
  }
  func.func @transform_1(%arg0: i32, %arg1: i32) -> i32 {
    %c0_i32 = arith.constant 0 : i32
    %c0_i32_0 = arith.constant 0 : i32
    return %c0_i32 : i32
  }
  func.func @transform_2(%arg0: i32, %arg1: i32) -> (i32, i32, i32) {
    %c0_i32 = arith.constant 0 : i32
    %c0_i32_0 = arith.constant 0 : i32
    return %arg0, %c0_i32, %arg1 : i32, i32, i32
  }
  func.func @transform_3(%arg0: i32, %arg1: i32) -> (i32, i32, i32) {
    %c0_i32 = arith.constant 0 : i32
    %c0_i32_0 = arith.constant 0 : i32
    return %arg0, %c0_i32, %arg1 : i32, i32, i32
  }
}

</mosaic_0001>

<llo_original>
// kernel: tpu_custom_call.1
$region0: #{tpu_custom_call.1}
  #allocation0 [shape = 'u32[]', space=smem, size = 0x4, offset = 0x4, fixed_abs, tag = 'smem constant byte address 0x4 - core index']
  #allocation1 [shape = 'u32[144,128]{1,0:T(1,128)}', space=vmem, size = 0x12000, scoped, tag = 'internal scratch']
  %s0 = inlined_call_operand.vmem [shape: f32[3,4,1], index: 0, kind: input, shape index: {}]
  %s1 = inlined_call_operand.vmem [shape: f32[3], index: 1, kind: input, shape index: {}]
  %s2 = inlined_call_operand.vmem [shape: f32[2,4,256], index: 2, kind: input, shape index: {}]
  %s3 = inlined_call_operand.vmem [shape: f32[2,3,256], index: 3, kind: output, shape index: {}]
  %s4 = sld [smem:[#allocation0]]
  $region26: #{tpu_custom_call.1} parent=0
    _
  %s6 = ssub.s32 1, %s4
  %s7 = scalar_select 0, %s6, %s4
  $region1: #{tpu_custom_call.1} parent=0
    #allocation2 [shape = 'u8[512]{0}', space=smem, size = 0x200, scoped, tag = 'input window, operand 1, single buffered']
    #allocation3 [shape = 's32[1]{0}', space=sflag, size = 0x4, scoped, tag = 'scoped memory for tpu_custom_call.1']
    %8 = vsyncpa [#allocation3], 0
    // Predicated region
    $region2: #{tpu_custom_call.1} parent=1 // pred_check
      _
    $region3: #{tpu_custom_call.1} parent=1 // pred_check_branch
      %10 = sbr.rel (0) target = $region5
    $region4: #{tpu_custom_call.1} parent=1 // pred_region
      _
    $region5: #{tpu_custom_call.1} parent=1 // pred_fallthru
      _
    // Predicated region
    $region6: #{tpu_custom_call.1} parent=1 // pred_check
      _
    $region7: #{tpu_custom_call.1} parent=1 // pred_check_branch
      %12 = sbr.rel (0) target = $region9
    $region8: #{tpu_custom_call.1} parent=1 // pred_region
      %s14 = ssub.s32 16, 16
      %15 = vsyncadd [#allocation3], %s14
      %s17 = sshll.u32 %s1, 4
      %s18 = int_to_ptr.vmem [resolvable:$true] %s17
      %20 = dma.vmem_to_smem %s18, 16, [#allocation2], [#allocation3]
    $region9: #{tpu_custom_call.1} parent=1 // pred_fallthru
      _
    // Predicated region
    $region10: #{tpu_custom_call.1} parent=1 // pred_check
      _
    $region11: #{tpu_custom_call.1} parent=1 // pred_check_branch
      %22 = sbr.rel (0) target = $region13
    $region12: #{tpu_custom_call.1} parent=1 // pred_region
      _
    $region13: #{tpu_custom_call.1} parent=1 // pred_fallthru
      _
    // Predicated region
    $region14: #{tpu_custom_call.1} parent=1 // pred_check
      _
    $region15: #{tpu_custom_call.1} parent=1 // pred_check_branch
      %24 = sbr.rel (0) target = $region17
    $region16: #{tpu_custom_call.1} parent=1 // pred_region
      %25 = dma.done [#allocation3], 16
    $region17: #{tpu_custom_call.1} parent=1 // pred_fallthru
      _
    %26 = sfence
    %v27 = vld [vmem:[%s2] sm:$0xff]
    %v28 = vld [vmem:[%s2 + $0x8] sm:$0xff]
    %v29 = vld [vmem:[%s0] sm:$0xf]
    %31 = vset.pattern.permute.xlu0 0
    %32 = vperm.xlu0 %31, %v29
    %v33 = vpop.permute.xlu0 %32
    %v35 = vunpack.c.l.s4 839922192
    %v36 = vunpack.c.0.s8 %v35
    %v37 = vlaneseq
    %v38 = vshrl.u32 %v37, 7
    %v39 = vsub.s32 %v36, %v38
    %v40 = vrot.slane %v33, %v39
    %v42 = vmul.f32 %v27, %v40
    %v43 = vmul.f32 %v28, %v40
    %v46 = vcombine.high %v42, %v42
    %v47 = vcombine.high %v43, %v43
    %vm50 = vcmask 1043456
    %v51 = vsel %vm50, %v42, 0.0
    %v52 = vrot.slane %v51, 4
    %v53 = vadd.f32 %v51, %v52
    %v54 = vrot.slane %v53, 2
    %v55 = vadd.f32 %v53, %v54
    %v56 = vrot.slane %v55, 1
    %v57 = vadd.f32 %v55, %v56
    %v58 = vsel %vm50, %v46, 0.0
    %v59 = vrot.slane %v58, 4
    %v60 = vadd.f32 %v58, %v59
    %v61 = vrot.slane %v60, 2
    %v62 = vadd.f32 %v60, %v61
    %v63 = vrot.slane %v62, 1
    %v64 = vadd.f32 %v62, %v63
    %v65 = vsel %vm50, %v43, 0.0
    %v66 = vrot.slane %v65, 4
    %v67 = vadd.f32 %v65, %v66
    %v68 = vrot.slane %v67, 2
    %v69 = vadd.f32 %v67, %v68
    %v70 = vrot.slane %v69, 1
    %v71 = vadd.f32 %v69, %v70
    %v72 = vsel %vm50, %v47, 0.0
    %v73 = vrot.slane %v72, 4
    %v74 = vadd.f32 %v72, %v73
    %v75 = vrot.slane %v74, 2
    %v76 = vadd.f32 %v74, %v75
    %v77 = vrot.slane %v76, 1
    %v78 = vadd.f32 %v76, %v77
    %s79 = sld [smem:[#allocation2]]
    %v80 = vstv %s79
    %v81 = vadd.f32 %v57, %v80
    %v82 = vadd.f32 %v64, %v80
    %v83 = vadd.f32 %v71, %v80
    %v84 = vadd.f32 %v78, %v80
    %v89 = vcombine.low %v81, %v82
    %v91 = vunpack.c.l.s4 1966171168
    %v92 = vunpack.c.0.s8 %v91
    %v93 = vlaneseq
    %v94 = vshrl.u32 %v93, 7
    %v95 = vsub.s32 %v92, %v94
    %v96 = vrot.slane %v89, %v95
    %v98 = vunpack.c.l.s4 1966171168
    %v99 = vunpack.c.0.s8 %v98
    %v100 = vlaneseq
    %v101 = vshrl.u32 %v100, 7
    %v102 = vsub.s32 %v99, %v101
    %v103 = vrot.slane %v96, %v102
    %v104 = vcombine.low %v83, %v84
    %v106 = vunpack.c.l.s4 1966171168
    %v107 = vunpack.c.0.s8 %v106
    %v108 = vlaneseq
    %v109 = vshrl.u32 %v108, 7
    %v110 = vsub.s32 %v107, %v109
    %v111 = vrot.slane %v104, %v110
    %v113 = vunpack.c.l.s4 1966171168
    %v114 = vunpack.c.0.s8 %v113
    %v115 = vlaneseq
    %v116 = vshrl.u32 %v115, 7
    %v117 = vsub.s32 %v114, %v116
    %v118 = vrot.slane %v111, %v117
    %v121 = vlaneseq
    %vm122 = vcmp.ge.s32.totalorder %v121, 0
    %vm123 = vcmp.lt.s32.totalorder %v121, 256
    %vm124 = vmand %vm122, %vm123
    %125 = vst.msk [vmem:[%s3] ss:$4 sm:$0x3] %vm124, %v103
    %s126 = scalar_lea.vmem %s3, 8
    %127 = vst.msk [vmem:[%s126] ss:$4 sm:$0x3] %vm124, %v118
    %s128 = scalar_lea.vmem %s0, 4
    %v129 = vld [vmem:[%s128] sm:$0xf]
    %131 = vset.pattern.permute.xlu0 0
    %132 = vperm.xlu0 %131, %v129
    %v133 = vpop.permute.xlu0 %132
    %v135 = vunpack.c.l.s4 839922192
    %v136 = vunpack.c.0.s8 %v135
    %v137 = vlaneseq
    %v138 = vshrl.u32 %v137, 7
    %v139 = vsub.s32 %v136, %v138
    %v140 = vrot.slane %v133, %v139
    %v142 = vmul.f32 %v27, %v140
    %v143 = vmul.f32 %v28, %v140
    %v146 = vcombine.high %v142, %v142
    %v147 = vcombine.high %v143, %v143
    %v150 = vsel %vm50, %v142, 0.0
    %v151 = vrot.slane %v150, 4
    %v152 = vadd.f32 %v150, %v151
    %v153 = vrot.slane %v152, 2
    %v154 = vadd.f32 %v152, %v153
    %v155 = vrot.slane %v154, 1
    %v156 = vadd.f32 %v154, %v155
    %v157 = vsel %vm50, %v146, 0.0
    %v158 = vrot.slane %v157, 4
    %v159 = vadd.f32 %v157, %v158
    %v160 = vrot.slane %v159, 2
    %v161 = vadd.f32 %v159, %v160
    %v162 = vrot.slane %v161, 1
    %v163 = vadd.f32 %v161, %v162
    %v164 = vsel %vm50, %v143, 0.0
    %v165 = vrot.slane %v164, 4
    %v166 = vadd.f32 %v164, %v165
    %v167 = vrot.slane %v166, 2
    %v168 = vadd.f32 %v166, %v167
    %v169 = vrot.slane %v168, 1
    %v170 = vadd.f32 %v168, %v169
    %v171 = vsel %vm50, %v147, 0.0
    %v172 = vrot.slane %v171, 4
    %v173 = vadd.f32 %v171, %v172
    %v174 = vrot.slane %v173, 2
    %v175 = vadd.f32 %v173, %v174
    %v176 = vrot.slane %v175, 1
    %v177 = vadd.f32 %v175, %v176
    %s178 = sld [smem:[#allocation2 + $0x1]]
    %v179 = vstv %s178
    %v180 = vadd.f32 %v156, %v179
    %v181 = vadd.f32 %v163, %v179
    %v182 = vadd.f32 %v170, %v179
    %v183 = vadd.f32 %v177, %v179
    %v188 = vcombine.low %v180, %v181
    %v190 = vunpack.c.l.s4 1966171168
    %v191 = vunpack.c.0.s8 %v190
    %v192 = vlaneseq
    %v193 = vshrl.u32 %v192, 7
    %v194 = vsub.s32 %v191, %v193
    %v195 = vrot.slane %v188, %v194
    %v197 = vunpack.c.l.s4 1966171168
    %v198 = vunpack.c.0.s8 %v197
    %v199 = vlaneseq
    %v200 = vshrl.u32 %v199, 7
    %v201 = vsub.s32 %v198, %v200
    %v202 = vrot.slane %v195, %v201
    %v203 = vcombine.low %v182, %v183
    %v205 = vunpack.c.l.s4 1966171168
    %v206 = vunpack.c.0.s8 %v205
    %v207 = vlaneseq
    %v208 = vshrl.u32 %v207, 7
    %v209 = vsub.s32 %v206, %v208
    %v210 = vrot.slane %v203, %v209
    %v212 = vunpack.c.l.s4 1966171168
    %v213 = vunpack.c.0.s8 %v212
    %v214 = vlaneseq
    %v215 = vshrl.u32 %v214, 7
    %v216 = vsub.s32 %v213, %v215
    %v217 = vrot.slane %v210, %v216
    %s220 = scalar_lea.vmem %s3, 1
    %221 = vst.msk [vmem:[%s220] ss:$4 sm:$0x3] %vm124, %v202
    %s222 = scalar_lea.vmem %s3, 9
    %223 = vst.msk [vmem:[%s222] ss:$4 sm:$0x3] %vm124, %v217
    %s224 = scalar_lea.vmem %s0, 8
    %v225 = vld [vmem:[%s224] sm:$0xf]
    %227 = vset.pattern.permute.xlu0 0
    %228 = vperm.xlu0 %227, %v225
    %v229 = vpop.permute.xlu0 %228
    %v231 = vunpack.c.l.s4 839922192
    %v232 = vunpack.c.0.s8 %v231
    %v233 = vlaneseq
    %v234 = vshrl.u32 %v233, 7
    %v235 = vsub.s32 %v232, %v234
    %v236 = vrot.slane %v229, %v235
    %v238 = vmul.f32 %v27, %v236
    %v239 = vmul.f32 %v28, %v236
    %v242 = vcombine.high %v238, %v238
    %v243 = vcombine.high %v239, %v239
    %v246 = vsel %vm50, %v238, 0.0
    %v247 = vrot.slane %v246, 4
    %v248 = vadd.f32 %v246, %v247
    %v249 = vrot.slane %v248, 2
    %v250 = vadd.f32 %v248, %v249
    %v251 = vrot.slane %v250, 1
    %v252 = vadd.f32 %v250, %v251
    %v253 = vsel %vm50, %v242, 0.0
    %v254 = vrot.slane %v253, 4
    %v255 = vadd.f32 %v253, %v254
    %v256 = vrot.slane %v255, 2
    %v257 = vadd.f32 %v255, %v256
    %v258 = vrot.slane %v257, 1
    %v259 = vadd.f32 %v257, %v258
    %v260 = vsel %vm50, %v239, 0.0
    %v261 = vrot.slane %v260, 4
    %v262 = vadd.f32 %v260, %v261
    %v263 = vrot.slane %v262, 2
    %v264 = vadd.f32 %v262, %v263
    %v265 = vrot.slane %v264, 1
    %v266 = vadd.f32 %v264, %v265
    %v267 = vsel %vm50, %v243, 0.0
    %v268 = vrot.slane %v267, 4
    %v269 = vadd.f32 %v267, %v268
    %v270 = vrot.slane %v269, 2
    %v271 = vadd.f32 %v269, %v270
    %v272 = vrot.slane %v271, 1
    %v273 = vadd.f32 %v271, %v272
    %s274 = sld [smem:[#allocation2 + $0x2]]
    %v275 = vstv %s274
    %v276 = vadd.f32 %v252, %v275
    %v277 = vadd.f32 %v259, %v275
    %v278 = vadd.f32 %v266, %v275
    %v279 = vadd.f32 %v273, %v275
    %v284 = vcombine.low %v276, %v277
    %v286 = vunpack.c.l.s4 1966171168
    %v287 = vunpack.c.0.s8 %v286
    %v288 = vlaneseq
    %v289 = vshrl.u32 %v288, 7
    %v290 = vsub.s32 %v287, %v289
    %v291 = vrot.slane %v284, %v290
    %v293 = vunpack.c.l.s4 1966171168
    %v294 = vunpack.c.0.s8 %v293
    %v295 = vlaneseq
    %v296 = vshrl.u32 %v295, 7
    %v297 = vsub.s32 %v294, %v296
    %v298 = vrot.slane %v291, %v297
    %v299 = vcombine.low %v278, %v279
    %v301 = vunpack.c.l.s4 1966171168
    %v302 = vunpack.c.0.s8 %v301
    %v303 = vlaneseq
    %v304 = vshrl.u32 %v303, 7
    %v305 = vsub.s32 %v302, %v304
    %v306 = vrot.slane %v299, %v305
    %v308 = vunpack.c.l.s4 1966171168
    %v309 = vunpack.c.0.s8 %v308
    %v310 = vlaneseq
    %v311 = vshrl.u32 %v310, 7
    %v312 = vsub.s32 %v309, %v311
    %v313 = vrot.slane %v306, %v312
    %s316 = scalar_lea.vmem %s3, 2
    %317 = vst.msk [vmem:[%s316] ss:$4 sm:$0x3] %vm124, %v298
    %s318 = scalar_lea.vmem %s3, 10
    %319 = vst.msk [vmem:[%s318] ss:$4 sm:$0x3] %vm124, %v313
    // Predicated region
    $region18: #{tpu_custom_call.1} parent=1 // pred_check
      _
    $region19: #{tpu_custom_call.1} parent=1 // pred_check_branch
      %321 = sbr.rel (0) target = $region21
    $region20: #{tpu_custom_call.1} parent=1 // pred_region
      _
    $region21: #{tpu_custom_call.1} parent=1 // pred_fallthru
      _
    // Predicated region
    $region22: #{tpu_custom_call.1} parent=1 // pred_check
      _
    $region23: #{tpu_custom_call.1} parent=1 // pred_check_branch
      %323 = sbr.rel (0) target = $region25
    $region24: #{tpu_custom_call.1} parent=1 // pred_region
      _
    $region25: #{tpu_custom_call.1} parent=1 // pred_fallthru
      _
    %324 = vsyncpa [#allocation3], 1

</llo_original>
